<compile_context>
chip_gen: v5e
topology: v5e:2x2
jax: 0.10.0
libtpu: 0.0.40
codegen_flags: <defaults>
</compile_context>

<pallas_src>
import jax
import jax.numpy as jnp
from jax.experimental import pallas as pl
from jax.experimental.pallas import tpu as pltpu


def _round_up(x: int, m: int) -> int:
    return ((x + m - 1) // m) * m


# ----------------------------------------------------------------------------
# Kernel bodies
# ----------------------------------------------------------------------------

def _layer0_tanh(x_ref, u_ref, w0_ref, b0_ref):
    """tanh(concat(x,u) @ W0' + b0') with normalization pre-folded into W0'/b0'.

    in_features is tiny (obs_dim + act_dim = 3) so a sum of rank-1 VPU updates
    beats a heavily padded K=3 MXU pass; mathematically identical to the
    concat + matmul form.
    """
    x = x_ref[...]                    # (TB, obs_dim)
    u = u_ref[...]                    # (TB, act_dim)
    w0 = w0_ref[...]                  # (obs_dim + act_dim, H1)
    obs_dim = x.shape[1]
    pre = b0_ref[...]                 # (1, H1) -> broadcasts over the tile
    for k in range(obs_dim):
        pre = pre + x[:, k:k + 1] * w0[k:k + 1, :]
    for k in range(u.shape[1]):
        pre = pre + u[:, k:k + 1] * w0[obs_dim + k:obs_dim + k + 1, :]
    return jnp.tanh(pre)              # EUP


def _bf16x3_dot(h, w_hi, w_lo):
    """h @ W with bf16 MXU operands and f32 accumulation (3-pass split).

    W is pre-split at prep time into W_hi (bf16) + W_lo (bf16 residual);
    h is split in-kernel (two cheap VPU ops).  The dropped h_lo*W_lo term is
    O(2^-16) relative -> ~1e-5 absolute error at these scales.
    """
    h_hi = h.astype(jnp.bfloat16)
    h_lo = (h - h_hi.astype(jnp.float32)).astype(jnp.bfloat16)
    acc = jnp.dot(h_hi, w_hi, preferred_element_type=jnp.float32)
    acc = acc + jnp.dot(h_lo, w_hi, preferred_element_type=jnp.float32)
    acc = acc + jnp.dot(h_hi, w_lo, preferred_element_type=jnp.float32)
    return acc


def mlp_kernel_bf16x3(x_ref, u_ref, w0_ref, b0_ref,
                      w1h_ref, w1l_ref, b1_ref,
                      w2h_ref, w2l_ref, b2_ref,
                      o_ref):
    h1 = _layer0_tanh(x_ref, u_ref, w0_ref, b0_ref)                  # (TB, H1)
    h2 = jnp.tanh(_bf16x3_dot(h1, w1h_ref[...], w1l_ref[...]) + b1_ref[...])
    o_ref[...] = _bf16x3_dot(h2, w2h_ref[...], w2l_ref[...]) + b2_ref[...]


def mlp_kernel_f32(x_ref, u_ref, w0_ref, b0_ref,
                   w1_ref, b1_ref, w2_ref, b2_ref,
                   o_ref):
    h1 = _layer0_tanh(x_ref, u_ref, w0_ref, b0_ref)
    h2 = jnp.tanh(
        jnp.dot(h1, w1_ref[...], preferred_element_type=jnp.float32)
        + b1_ref[...])
    o_ref[...] = (
        jnp.dot(h2, w2_ref[...], preferred_element_type=jnp.float32)
        + b2_ref[...])


# ----------------------------------------------------------------------------
# Parameter prep (one-time, outside the kernel)
# ----------------------------------------------------------------------------

def prepare_params(params, *, obs_dim, mxu_bf16x3=True):
    """Fold normalization into layer 0, zero-pad hidden/out dims to 128-multiples,
    optionally pre-split W1/W2 into bf16 hi/lo pairs for the bf16x3 MXU path."""
    f32 = jnp.float32
    mu = params["mu"].astype(f32).reshape(1, -1)
    sigma = params["sigma"].astype(f32).reshape(1, -1)
    inv_sigma = 1.0 / (sigma + 1e-10)

    w0 = params["w0"].astype(f32)                    # (in_features, hidden1)
    b0 = params["b0"].astype(f32).reshape(1, -1)
    w1 = params["w1"].astype(f32)                    # (hidden1, hidden2)
    b1 = params["b1"].astype(f32).reshape(1, -1)
    w2 = params["w2"].astype(f32)                    # (hidden2, out_dim)
    b2 = params["b2"].astype(f32).reshape(1, -1)

    in_features, h1 = w0.shape
    _, h2 = w1.shape
    _, out_dim = w2.shape

    # Fold (z - mu) * inv_sigma into W0/b0:  z_std @ W0 + b0
    #   == z @ (inv_sigma[:,None] * W0) + (b0 - sum_k (mu*inv_sigma)_k * W0[k,:])
    # (pure elementwise f32 math -> no dependence on matmul default precision)
    w0f = w0 * inv_sigma.reshape(-1, 1)
    b0f = b0 - jnp.sum((mu * inv_sigma).reshape(-1, 1) * w0, axis=0,
                       keepdims=True)

    # Zero-pad to clean 128-aligned MXU tiles / lane-dense output.  Exact:
    # padded lanes carry 0 through tanh and contribute 0 to the next matmul.
    H1 = _round_up(h1, 128)        # 200 -> 256
    H2 = _round_up(h2, 128)        # 200 -> 256
    OUT = _round_up(out_dim, 128)  # 4   -> 128

    w0p = jnp.zeros((in_features, H1), f32).at[:, :h1].set(w0f)
    b0p = jnp.zeros((1, H1), f32).at[:, :h1].set(b0f)
    w1p = jnp.zeros((H1, H2), f32).at[:h1, :h2].set(w1)
    b1p = jnp.zeros((1, H2), f32).at[:, :h2].set(b1)
    w2p = jnp.zeros((H2, OUT), f32).at[:h2, :out_dim].set(w2)
    b2p = jnp.zeros((1, OUT), f32).at[:, :out_dim].set(b2)

    prepped = {
        "w0": w0p, "b0": b0p, "b1": b1p, "b2": b2p,
        "out_dim": out_dim, "mxu_bf16x3": bool(mxu_bf16x3),
    }
    if mxu_bf16x3:
        for name, w in (("w1", w1p), ("w2", w2p)):
            w_hi = w.astype(jnp.bfloat16)
            w_lo = (w - w_hi.astype(f32)).astype(jnp.bfloat16)
            prepped[name + "_hi"] = w_hi
            prepped[name + "_lo"] = w_lo
    else:
        prepped["w1"] = w1p
        prepped["w2"] = w2p
    return prepped


# ----------------------------------------------------------------------------
# Wrapper
# ----------------------------------------------------------------------------

def mlp_forward(x, u, prepped, *, batch_tile=1024):
    """x: (B, obs_dim), u: (B, act_dim). Returns (B, out_dim)."""
    B, obs_dim = x.shape
    act_dim = u.shape[1]
    bf16x3 = prepped["mxu_bf16x3"]

    H1 = prepped["w0"].shape[1]
    if bf16x3:
        H2 = prepped["w1_hi"].shape[1]
        OUT = prepped["w2_hi"].shape[1]
    else:
        H2 = prepped["w1"].shape[1]
        OUT = prepped["w2"].shape[1]
    out_dim = prepped["out_dim"]

    x = x.astype(jnp.float32)
    u = u.astype(jnp.float32)

    # Batch tile: multiple of 8 sublanes, capped at batch_tile, and chosen so
    # the grid has >= 2 steps whenever B > 8 (feeds both v7x TensorCores via
    # the "parallel" grid axis).  No wrapper-side padding: the ragged last
    # block is clipped by Pallas (padded rows are never written back).
    TB = min(_round_up(batch_tile, 8), max(8, _round_up(pl.cdiv(B, 2), 8)))
    grid = (pl.cdiv(B, TB),)

    def tiled(shape):
        return pl.BlockSpec(shape, lambda i: (i, 0))

    def resident(shape):
        # Constant block index -> stays VMEM-resident across all grid steps.
        return pl.BlockSpec(shape, lambda i: (0, 0))

    if bf16x3:
        kernel = mlp_kernel_bf16x3
        weight_args = (prepped["w0"], prepped["b0"],
                       prepped["w1_hi"], prepped["w1_lo"], prepped["b1"],
                       prepped["w2_hi"], prepped["w2_lo"], prepped["b2"])
        weight_specs = [
            resident((obs_dim + act_dim, H1)), resident((1, H1)),
            resident((H1, H2)), resident((H1, H2)), resident((1, H2)),
            resident((H2, OUT)), resident((H2, OUT)), resident((1, OUT)),
        ]
    else:
        kernel = mlp_kernel_f32
        weight_args = (prepped["w0"], prepped["b0"],
                       prepped["w1"], prepped["b1"],
                       prepped["w2"], prepped["b2"])
        weight_specs = [
            resident((obs_dim + act_dim, H1)), resident((1, H1)),
            resident((H1, H2)), resident((1, H2)),
            resident((H2, OUT)), resident((1, OUT)),
        ]

    in_specs = [tiled((TB, obs_dim)), tiled((TB, act_dim))] + weight_specs
    out_spec = pl.BlockSpec((TB, OUT), lambda i: (i, 0))   # lane-dense store

    y = pl.pallas_call(
        kernel,
        out_shape=jax.ShapeDtypeStruct((B, OUT), jnp.float32),
        grid=grid,
        in_specs=in_specs,
        out_specs=out_spec,
        compiler_params=pltpu.CompilerParams(
            dimension_semantics=("parallel",)),   # megacore sharding on v7x
    )(x, u, *weight_args)

    return y[:, :out_dim]


# ----------------------------------------------------------------------------
# Deterministic init + pure-JAX reference (for self-check)
# ----------------------------------------------------------------------------

def init_params(key, act_dim=1, obs_dim=2, hidden1=200, hidden2=200, out_dim=4):
    """Init mirroring nn.Linear defaults, plus non-trivial mu/sigma so the
    normalization-folding path is actually exercised."""
    in_features = obs_dim + act_dim
    ks = jax.random.split(key, 8)

    def linear(kw, kb, fan_in, fan_out):
        bound = 1.0 / jnp.sqrt(jnp.float32(fan_in))
        # stored as (in, out): transpose of PyTorch's (out, in)
        w = jax.random.uniform(kw, (fan_in, fan_out), jnp.float32, -bound, bound)
        b = jax.random.uniform(kb, (1, fan_out), jnp.float32, -bound, bound)
        return w, b

    w0, b0 = linear(ks[0], ks[1], in_features, hidden1)
    w1, b1 = linear(ks[2], ks[3], hidden1, hidden2)
    w2, b2 = linear(ks[4], ks[5], hidden2, out_dim)

    mu = 0.3 * jax.random.normal(ks[6], (1, in_features), jnp.float32)
    sigma = jax.random.uniform(ks[7], (1, in_features), jnp.float32, 0.5, 1.5)

    return {"mu": mu, "sigma": sigma,
            "w0": w0, "b0": b0, "w1": w1, "b1": b1, "w2": w2, "b2": b2}


def mlp_forward_ref(x, u, params):
    """Pure-JAX reference at full f32 matmul precision."""
    hp = jax.lax.Precision.HIGHEST
    z = jnp.concatenate([x, u], axis=-1)
    z_std = (z - params["mu"]) / (params["sigma"] + 1e-10)
    h1 = jnp.tanh(jnp.dot(z_std, params["w0"], precision=hp) + params["b0"])
    h2 = jnp.tanh(jnp.dot(h1, params["w1"], precision=hp) + params["b1"])
    return jnp.dot(h2, params["w2"], precision=hp) + params["b2"]


if __name__ == "__main__":
    key = jax.random.PRNGKey(0)
    k_params, k_x, k_u = jax.random.split(key, 3)

    act_dim, obs_dim, hidden1, hidden2, out_dim = 1, 2, 200, 200, 4
    batch = 50  # not a multiple of the tile -> exercises the ragged last block

    params = init_params(k_params, act_dim=act_dim, obs_dim=obs_dim,
                         hidden1=hidden1, hidden2=hidden2, out_dim=out_dim)

    x = jax.random.normal(k_x, (batch, obs_dim), jnp.float32)
    u = jax.random.normal(k_u, (batch, act_dim), jnp.float32)

    y_ref = mlp_forward_ref(x, u, params)

    # 1) Exact path: f32 MXU operands, strict 1e-5 check.
    #    batch_tile=32 -> TB=32, grid=2 steps with a ragged last block.
    prepped_f32 = prepare_params(params, obs_dim=obs_dim, mxu_bf16x3=False)
    y = jax.block_until_ready(mlp_forward(x, u, prepped_f32, batch_tile=32))
    assert y.shape == (batch, out_dim), y.shape
    err = float(jnp.max(jnp.abs(y - y_ref)))
    assert jnp.allclose(y, y_ref, atol=1e-5, rtol=1e-5), err

    # 2) Throughput path (default): bf16x3 MXU operands + f32 accumulation.
    #    Dropped h_lo*W_lo term gives a ~1e-5-scale rounding envelope for
    #    K=256, so this path is validated at 1e-4 (use mxu_bf16x3=False when a
    #    strict 1e-5 match to f32 is required).
    prepped_b3 = prepare_params(params, obs_dim=obs_dim, mxu_bf16x3=True)
    y3 = jax.block_until_ready(mlp_forward(x, u, prepped_b3, batch_tile=32))
    assert y3.shape == (batch, out_dim), y3.shape
    err3 = float(jnp.max(jnp.abs(y3 - y_ref)))
    assert jnp.allclose(y3, y_ref, atol=1e-4, rtol=1e-4), err3

    print("KERNEL_OK")
</pallas_src>

<mosaic_0001>
module attributes {stable_mosaic.version = 11 : i64} {
  func.func @mlp_kernel_f32(%arg0: i32, %arg1: memref<32x2xf32, #tpu.memory_space<vmem>>, %arg2: memref<32x1xf32, #tpu.memory_space<vmem>>, %arg3: memref<3x256xf32, #tpu.memory_space<vmem>>, %arg4: memref<1x256xf32, #tpu.memory_space<vmem>>, %arg5: memref<256x256xf32, #tpu.memory_space<vmem>>, %arg6: memref<1x256xf32, #tpu.memory_space<vmem>>, %arg7: memref<256x128xf32, #tpu.memory_space<vmem>>, %arg8: memref<1x128xf32, #tpu.memory_space<vmem>>, %arg9: memref<32x128xf32, #tpu.memory_space<vmem>>) attributes {dimension_semantics = [#tpu.dimension_semantics<parallel>], iteration_bounds = array<i64: 2>, scalar_prefetch = 0 : i64, scratch_operands = 0 : i64, tpu.core_type = #tpu.core_type<tc>, window_params = [{transform_indices = @transform_0, window_bounds = array<i64: 32, 2>}, {transform_indices = @transform_1, window_bounds = array<i64: 32, 1>}, {pipeline_mode = #tpu.pipeline_mode<synchronous>, transform_indices = @transform_2, window_bounds = array<i64: 3, 256>}, {pipeline_mode = #tpu.pipeline_mode<synchronous>, transform_indices = @transform_3, window_bounds = array<i64: 1, 256>}, {pipeline_mode = #tpu.pipeline_mode<synchronous>, transform_indices = @transform_4, window_bounds = array<i64: 256, 256>}, {pipeline_mode = #tpu.pipeline_mode<synchronous>, transform_indices = @transform_5, window_bounds = array<i64: 1, 256>}, {pipeline_mode = #tpu.pipeline_mode<synchronous>, transform_indices = @transform_6, window_bounds = array<i64: 256, 128>}, {pipeline_mode = #tpu.pipeline_mode<synchronous>, transform_indices = @transform_7, window_bounds = array<i64: 1, 128>}, {transform_indices = @transform_8, window_bounds = array<i64: 32, 128>}]} {
    %c0 = arith.constant 0 : index
    %c0_0 = arith.constant 0 : index
    %0 = vector.load %arg1[%c0, %c0_0] : memref<32x2xf32, #tpu.memory_space<vmem>>, vector<32x2xf32>
    %c0_1 = arith.constant 0 : index
    %c0_2 = arith.constant 0 : index
    %1 = vector.load %arg2[%c0_1, %c0_2] : memref<32x1xf32, #tpu.memory_space<vmem>>, vector<32x1xf32>
    %c0_3 = arith.constant 0 : index
    %c0_4 = arith.constant 0 : index
    %2 = vector.load %arg3[%c0_3, %c0_4] : memref<3x256xf32, #tpu.memory_space<vmem>>, vector<3x256xf32>
    %c0_5 = arith.constant 0 : index
    %c0_6 = arith.constant 0 : index
    %3 = vector.load %arg4[%c0_5, %c0_6] : memref<1x256xf32, #tpu.memory_space<vmem>>, vector<1x256xf32>
    %4 = vector.extract_strided_slice %0 {offsets = [0, 0], sizes = [32, 1], strides = [1, 1]} : vector<32x2xf32> to vector<32x1xf32>
    %5 = vector.extract_strided_slice %2 {offsets = [0, 0], sizes = [1, 256], strides = [1, 1]} : vector<3x256xf32> to vector<1x256xf32>
    %6 = vector.broadcast %4 : vector<32x1xf32> to vector<32x256xf32>
    %7 = vector.broadcast %5 : vector<1x256xf32> to vector<32x256xf32>
    %8 = arith.mulf %6, %7 : vector<32x256xf32>
    %9 = vector.broadcast %3 : vector<1x256xf32> to vector<32x256xf32>
    %10 = arith.addf %9, %8 : vector<32x256xf32>
    %11 = vector.extract_strided_slice %0 {offsets = [0, 1], sizes = [32, 1], strides = [1, 1]} : vector<32x2xf32> to vector<32x1xf32>
    %12 = vector.extract_strided_slice %2 {offsets = [1, 0], sizes = [1, 256], strides = [1, 1]} : vector<3x256xf32> to vector<1x256xf32>
    %13 = vector.broadcast %11 : vector<32x1xf32> to vector<32x256xf32>
    %14 = vector.broadcast %12 : vector<1x256xf32> to vector<32x256xf32>
    %15 = arith.mulf %13, %14 : vector<32x256xf32>
    %16 = arith.addf %10, %15 : vector<32x256xf32>
    %17 = vector.extract_strided_slice %2 {offsets = [2, 0], sizes = [1, 256], strides = [1, 1]} : vector<3x256xf32> to vector<1x256xf32>
    %18 = vector.broadcast %1 : vector<32x1xf32> to vector<32x256xf32>
    %19 = vector.broadcast %17 : vector<1x256xf32> to vector<32x256xf32>
    %20 = arith.mulf %18, %19 : vector<32x256xf32>
    %21 = arith.addf %16, %20 : vector<32x256xf32>
    %22 = math.tanh %21 : vector<32x256xf32>
    %c0_7 = arith.constant 0 : index
    %c0_8 = arith.constant 0 : index
    %23 = vector.load %arg5[%c0_7, %c0_8] : memref<256x256xf32, #tpu.memory_space<vmem>>, vector<256x256xf32>
    %cst = arith.constant dense<0.000000e+00> : vector<32x256xf32>
    %24 = tpu.matmul %22, %23, %cst {dimension_numbers = #tpu.dot_dimension_numbers<[1], [0], [0], [1], [0, 0, 1, 1], [], []>} : vector<32x256xf32>, vector<256x256xf32>, vector<32x256xf32> -> vector<32x256xf32>
    %c0_9 = arith.constant 0 : index
    %c0_10 = arith.constant 0 : index
    %25 = vector.load %arg6[%c0_9, %c0_10] : memref<1x256xf32, #tpu.memory_space<vmem>>, vector<1x256xf32>
    %26 = vector.broadcast %25 : vector<1x256xf32> to vector<32x256xf32>
    %27 = arith.addf %24, %26 : vector<32x256xf32>
    %28 = math.tanh %27 : vector<32x256xf32>
    %c0_11 = arith.constant 0 : index
    %c0_12 = arith.constant 0 : index
    %29 = vector.load %arg7[%c0_11, %c0_12] : memref<256x128xf32, #tpu.memory_space<vmem>>, vector<256x128xf32>
    %cst_13 = arith.constant dense<0.000000e+00> : vector<32x128xf32>
    %30 = tpu.matmul %28, %29, %cst_13 {dimension_numbers = #tpu.dot_dimension_numbers<[1], [0], [0], [1], [0, 0, 1, 1], [], []>} : vector<32x256xf32>, vector<256x128xf32>, vector<32x128xf32> -> vector<32x128xf32>
    %c0_14 = arith.constant 0 : index
    %c0_15 = arith.constant 0 : index
    %31 = vector.load %arg8[%c0_14, %c0_15] : memref<1x128xf32, #tpu.memory_space<vmem>>, vector<1x128xf32>
    %32 = vector.broadcast %31 : vector<1x128xf32> to vector<32x128xf32>
    %33 = arith.addf %30, %32 : vector<32x128xf32>
    %c0_16 = arith.constant 0 : index
    %c0_17 = arith.constant 0 : index
    %34 = vector.load %arg9[%c0_16, %c0_17] : memref<32x128xf32, #tpu.memory_space<vmem>>, vector<32x128xf32>
    tpu.vector_store %arg9[%c0_16, %c0_17], %33 {strides = array<i32>} : memref<32x128xf32, #tpu.memory_space<vmem>>, vector<32x128xf32>,
    return
  }
  func.func @transform_0(%arg0: i32) -> (i32, i32) {
    %c0_i32 = arith.constant 0 : i32
    %c0_i32_0 = arith.constant 0 : i32
    return %arg0, %c0_i32 : i32, i32
  }
  func.func @transform_1(%arg0: i32) -> (i32, i32) {
    %c0_i32 = arith.constant 0 : i32
    %c0_i32_0 = arith.constant 0 : i32
    return %arg0, %c0_i32 : i32, i32
  }
  func.func @transform_2(%arg0: i32) -> (i32, i32) {
    %c0_i32 = arith.constant 0 : i32
    %c0_i32_0 = arith.constant 0 : i32
    %c0_i32_1 = arith.constant 0 : i32
    return %c0_i32, %c0_i32_0 : i32, i32
  }
  func.func @transform_3(%arg0: i32) -> (i32, i32) {
    %c0_i32 = arith.constant 0 : i32
    %c0_i32_0 = arith.constant 0 : i32
    %c0_i32_1 = arith.constant 0 : i32
    return %c0_i32, %c0_i32_0 : i32, i32
  }
  func.func @transform_4(%arg0: i32) -> (i32, i32) {
    %c0_i32 = arith.constant 0 : i32
    %c0_i32_0 = arith.constant 0 : i32
    %c0_i32_1 = arith.constant 0 : i32
    return %c0_i32, %c0_i32_0 : i32, i32
  }
  func.func @transform_5(%arg0: i32) -> (i32, i32) {
    %c0_i32 = arith.constant 0 : i32
    %c0_i32_0 = arith.constant 0 : i32
    %c0_i32_1 = arith.constant 0 : i32
    return %c0_i32, %c0_i32_0 : i32, i32
  }
  func.func @transform_6(%arg0: i32) -> (i32, i32) {
    %c0_i32 = arith.constant 0 : i32
    %c0_i32_0 = arith.constant 0 : i32
    %c0_i32_1 = arith.constant 0 : i32
    return %c0_i32, %c0_i32_0 : i32, i32
  }
  func.func @transform_7(%arg0: i32) -> (i32, i32) {
    %c0_i32 = arith.constant 0 : i32
    %c0_i32_0 = arith.constant 0 : i32
    %c0_i32_1 = arith.constant 0 : i32
    return %c0_i32, %c0_i32_0 : i32, i32
  }
  func.func @transform_8(%arg0: i32) -> (i32, i32) {
    %c0_i32 = arith.constant 0 : i32
    %c0_i32_0 = arith.constant 0 : i32
    return %arg0, %c0_i32 : i32, i32
  }
}

</mosaic_0001>

<llo_original>
// kernel: tpu_custom_call.1
$region0: #{tpu_custom_call.1}
  #allocation0 [shape = 'u32[]', space=smem, size = 0x4, offset = 0x4, fixed_abs, tag = 'smem constant byte address 0x4 - core index']
  #allocation1 [shape = 'u32[72,128]{1,0:T(1,128)}', space=vmem, size = 0x9000, scoped, tag = 'internal scratch']
  %s0 = inlined_call_operand.vmem [shape: f32[50,2], index: 0, kind: input, shape index: {}]
  %s1 = inlined_call_operand.vmem [shape: f32[50,1], index: 1, kind: input, shape index: {}]
  %s2 = inlined_call_operand.vmem [shape: f32[3,256], index: 2, kind: input, shape index: {}]
  %s3 = inlined_call_operand.vmem [shape: f32[1,256], index: 3, kind: input, shape index: {}]
  %s4 = inlined_call_operand.hbm [shape: f32[256,256], index: 4, kind: input, shape index: {}]
  %s5 = inlined_call_operand.vmem [shape: f32[1,256], index: 5, kind: input, shape index: {}]
  %s6 = inlined_call_operand.hbm [shape: f32[256,128], index: 6, kind: input, shape index: {}]
  %s7 = inlined_call_operand.vmem [shape: f32[1,128], index: 7, kind: input, shape index: {}]
  %s8 = inlined_call_operand.hbm [shape: f32[50,128], index: 8, kind: output, shape index: {}]
  %s9 = sld [smem:[#allocation0]]
  $region73: #{tpu_custom_call.1} parent=0
    _
  %s11 = ssub.s32 1, %s9
  %s12 = scalar_select 0, %s11, %s9
  $region1: #{tpu_custom_call.1} parent=0
    #allocation2 [shape = 'u8[262144]{0}', space=vmem, size = 0x40000, scoped, tag = 'input window, operand 4, single buffered']
    #allocation3 [shape = 's32[2]{0}', space=sflag, size = 0x8, scoped, tag = 'scoped memory for tpu_custom_call.1']
    #allocation4 [shape = 's32[2]{0}', space=sflag, size = 0x8, scoped, tag = 'scoped memory for tpu_custom_call.1']
    #allocation5 [shape = 'u8[131072]{0}', space=vmem, size = 0x20000, scoped, tag = 'input window, operand 6, single buffered']
    #allocation6 [shape = 's32[1]{0}', space=sflag, size = 0x4, scoped, tag = 'scoped memory for tpu_custom_call.1']
    #allocation7 [shape = 'u8[32768]{0}', space=vmem, size = 0x8000, scoped, tag = 'output window, operand 0']
    %13 = vsyncpa [#allocation3], 0
    %14 = vsyncpa [#allocation6], 0
    %15 = vsyncpa [#allocation4], 0
    %s16 = scalar_lea.sflag [#allocation4], 1
    %17 = vsyncpa %s16, 0
    loop: start=0, step=1, limit=4
    $region2: #{tpu_custom_call.1} parent=1 // loop_pre_header
      _
    $region3: #{tpu_custom_call.1} parent=1 // loop_header
      %s19 = sphi 0, %s23
      %p20 = scmp.ge.s32.totalorder %s19, 4
      %s29 = sphi 0, %s31
      %s32 = sphi 0, %s29
      %s33 = sphi 0, %s32
      %s49 = sphi 0, %s33
      %s55 = sphi 0, %s57
      %s58 = sphi 0, %s55
      %s59 = sphi 0, %s58
      %s75 = sphi 0, %s59
      %s79 = sphi 0, %s79
      %s81 = sphi 0, %s79
      %s82 = sphi 0, %s81
      %s96 = sphi 0, %s82
      %s100 = sphi 0, %s100
      %s102 = sphi 0, %s100
      %s103 = sphi 0, %s102
      %s117 = sphi 0, %s103
      %s121 = sphi 0, %s121
      %s123 = sphi 0, %s121
      %s124 = sphi 0, %s123
      %s138 = sphi 0, %s124
      %s142 = sphi 0, %s142
      %s144 = sphi 0, %s142
      %s145 = sphi 0, %s144
      %s159 = sphi 0, %s145
      %s163 = sphi 0, %s163
      %s165 = sphi 0, %s163
      %s166 = sphi 0, %s165
      %s180 = sphi 0, %s166
      %s184 = sphi 0, %s184
      %s186 = sphi 0, %s184
      %s187 = sphi 0, %s186
      %s201 = sphi 0, %s187
      %s207 = sphi 0, %s209
      %s210 = sphi 0, %s207
      %s211 = sphi 0, %s210
      %s227 = sphi 0, %s211
    $region4: #{tpu_custom_call.1} parent=1 // loop_header_branch
      %22 = sbr.rel (%p20) target = $region8
    $region5: #{tpu_custom_call.1} parent=1 // loop_body
      %s24 = ssub.s32 %s19, 1
      %s25 = ssub.s32 %s19, 2
      %s26 = sadd.s32 %s19, 1
      %s27 = ssub.s32 %s19, %s26
      %p28 = scmp.eq.s32.totalorder %s27, 0
      %s30 = sadd.s32 %s29, 1
      %s31 = scalar_select %p28, %s29, %s30
      %p34 = pneg %p28
      %p35 = scmp.eq.s32.totalorder %s19, 1
      %p36 = por %p34, %p35
      %p37 = scmp.ne.s32.totalorder %s29, %s32
      %p38 = scmp.eq.s32.totalorder %s19, 0
      %p39 = por %p37, %p38
      %p40 = scmp.ne.s32.totalorder %s29, %s32
      %p41 = scmp.eq.s32.totalorder %s24, 1
      %p42 = por %p40, %p41
      %p43 = scmp.ne.s32.totalorder %s32, %s33
      %p44 = scmp.eq.s32.totalorder %s24, 0
      %p45 = por %p43, %p44
      %p46 = scmp.ne.s32.totalorder %s32, %s33
      %p47 = scmp.eq.s32.totalorder %s25, 1
      %p48 = por %p46, %p47
      %p50 = scmp.ne.s32.totalorder %s33, %s49
      %p51 = scmp.eq.s32.totalorder %s25, 0
      %p52 = por %p50, %p51
      %s53 = ssub.s32 %s19, %s26
      %p54 = scmp.eq.s32.totalorder %s53, 0
      %s56 = sadd.s32 %s55, 1
      %s57 = scalar_select %p54, %s55, %s56
      %p60 = pneg %p54
      %p61 = scmp.eq.s32.totalorder %s19, 1
      %p62 = por %p60, %p61
      %p63 = scmp.ne.s32.totalorder %s55, %s58
      %p64 = scmp.eq.s32.totalorder %s19, 0
      %p65 = por %p63, %p64
      %p66 = scmp.ne.s32.totalorder %s55, %s58
      %p67 = scmp.eq.s32.totalorder %s24, 1
      %p68 = por %p66, %p67
      %p69 = scmp.ne.s32.totalorder %s58, %s59
      %p70 = scmp.eq.s32.totalorder %s24, 0
      %p71 = por %p69, %p70
      %p72 = scmp.ne.s32.totalorder %s58, %s59
      %p73 = scmp.eq.s32.totalorder %s25, 1
      %p74 = por %p72, %p73
      %p76 = scmp.ne.s32.totalorder %s59, %s75
      %p77 = scmp.eq.s32.totalorder %s25, 0
      %p78 = por %p76, %p77
      %s80 = sadd.s32 %s79, 1
      %p83 = scmp.eq.s32.totalorder %s19, 1
      %p84 = scmp.ne.s32.totalorder %s79, %s81
      %p85 = scmp.eq.s32.totalorder %s19, 0
      %p86 = por %p84, %p85
      %p87 = scmp.ne.s32.totalorder %s79, %s81
      %p88 = scmp.eq.s32.totalorder %s24, 1
      %p89 = por %p87, %p88
      %p90 = scmp.ne.s32.totalorder %s81, %s82
      %p91 = scmp.eq.s32.totalorder %s24, 0
      %p92 = por %p90, %p91
      %p93 = scmp.ne.s32.totalorder %s81, %s82
      %p94 = scmp.eq.s32.totalorder %s25, 1
      %p95 = por %p93, %p94
      %p97 = scmp.ne.s32.totalorder %s82, %s96
      %p98 = scmp.eq.s32.totalorder %s25, 0
      %p99 = por %p97, %p98
      %s101 = sadd.s32 %s100, 1
      %p104 = scmp.eq.s32.totalorder %s19, 1
      %p105 = scmp.ne.s32.totalorder %s100, %s102
      %p106 = scmp.eq.s32.totalorder %s19, 0
      %p107 = por %p105, %p106
      %p108 = scmp.ne.s32.totalorder %s100, %s102
      %p109 = scmp.eq.s32.totalorder %s24, 1
      %p110 = por %p108, %p109
      %p111 = scmp.ne.s32.totalorder %s102, %s103
      %p112 = scmp.eq.s32.totalorder %s24, 0
      %p113 = por %p111, %p112
      %p114 = scmp.ne.s32.totalorder %s102, %s103
      %p115 = scmp.eq.s32.totalorder %s25, 1
      %p116 = por %p114, %p115
      %p118 = scmp.ne.s32.totalorder %s103, %s117
      %p119 = scmp.eq.s32.totalorder %s25, 0
      %p120 = por %p118, %p119
      %s122 = sadd.s32 %s121, 1
      %p125 = scmp.eq.s32.totalorder %s19, 1
      %p126 = scmp.ne.s32.totalorder %s121, %s123
      %p127 = scmp.eq.s32.totalorder %s19, 0
      %p128 = por %p126, %p127
      %p129 = scmp.ne.s32.totalorder %s121, %s123
      %p130 = scmp.eq.s32.totalorder %s24, 1
      %p131 = por %p129, %p130
      %p132 = scmp.ne.s32.totalorder %s123, %s124
      %p133 = scmp.eq.s32.totalorder %s24, 0
      %p134 = por %p132, %p133
      %p135 = scmp.ne.s32.totalorder %s123, %s124
      %p136 = scmp.eq.s32.totalorder %s25, 1
      %p137 = por %p135, %p136
      %p139 = scmp.ne.s32.totalorder %s124, %s138
      %p140 = scmp.eq.s32.totalorder %s25, 0
      %p141 = por %p139, %p140
      %s143 = sadd.s32 %s142, 1
      %p146 = scmp.eq.s32.totalorder %s19, 1
      %p147 = scmp.ne.s32.totalorder %s142, %s144
      %p148 = scmp.eq.s32.totalorder %s19, 0
      %p149 = por %p147, %p148
      %p150 = scmp.ne.s32.totalorder %s142, %s144
      %p151 = scmp.eq.s32.totalorder %s24, 1
      %p152 = por %p150, %p151
      %p153 = scmp.ne.s32.totalorder %s144, %s145
      %p154 = scmp.eq.s32.totalorder %s24, 0
      %p155 = por %p153, %p154
      %p156 = scmp.ne.s32.totalorder %s144, %s145
      %p157 = scmp.eq.s32.totalorder %s25, 1
      %p158 = por %p156, %p157
      %p160 = scmp.ne.s32.totalorder %s145, %s159
      %p161 = scmp.eq.s32.totalorder %s25, 0
      %p162 = por %p160, %p161
      %s164 = sadd.s32 %s163, 1
      %p167 = scmp.eq.s32.totalorder %s19, 1
      %p168 = scmp.ne.s32.totalorder %s163, %s165
      %p169 = scmp.eq.s32.totalorder %s19, 0
      %p170 = por %p168, %p169
      %p171 = scmp.ne.s32.totalorder %s163, %s165
      %p172 = scmp.eq.s32.totalorder %s24, 1
      %p173 = por %p171, %p172
      %p174 = scmp.ne.s32.totalorder %s165, %s166
      %p175 = scmp.eq.s32.totalorder %s24, 0
      %p176 = por %p174, %p175
      %p177 = scmp.ne.s32.totalorder %s165, %s166
      %p178 = scmp.eq.s32.totalorder %s25, 1
      %p179 = por %p177, %p178
      %p181 = scmp.ne.s32.totalorder %s166, %s180
      %p182 = scmp.eq.s32.totalorder %s25, 0
      %p183 = por %p181, %p182
      %s185 = sadd.s32 %s184, 1
      %p188 = scmp.eq.s32.totalorder %s19, 1
      %p189 = scmp.ne.s32.totalorder %s184, %s186
      %p190 = scmp.eq.s32.totalorder %s19, 0
      %p191 = por %p189, %p190
      %p192 = scmp.ne.s32.totalorder %s184, %s186
      %p193 = scmp.eq.s32.totalorder %s24, 1
      %p194 = por %p192, %p193
      %p195 = scmp.ne.s32.totalorder %s186, %s187
      %p196 = scmp.eq.s32.totalorder %s24, 0
      %p197 = por %p195, %p196
      %p198 = scmp.ne.s32.totalorder %s186, %s187
      %p199 = scmp.eq.s32.totalorder %s25, 1
      %p200 = por %p198, %p199
      %p202 = scmp.ne.s32.totalorder %s187, %s201
      %p203 = scmp.eq.s32.totalorder %s25, 0
      %p204 = por %p202, %p203
      %s205 = ssub.s32 %s19, %s26
      %p206 = scmp.eq.s32.totalorder %s205, 0
      %s208 = sadd.s32 %s207, 1
      %s209 = scalar_select %p206, %s207, %s208
      %p212 = pneg %p206
      %p213 = scmp.eq.s32.totalorder %s19, 1
      %p214 = por %p212, %p213
      %p215 = scmp.ne.s32.totalorder %s207, %s210
      %p216 = scmp.eq.s32.totalorder %s19, 0
      %p217 = por %p215, %p216
      %p218 = scmp.ne.s32.totalorder %s207, %s210
      %p219 = scmp.eq.s32.totalorder %s24, 1
      %p220 = por %p218, %p219
      %p221 = scmp.ne.s32.totalorder %s210, %s211
      %p222 = scmp.eq.s32.totalorder %s24, 0
      %p223 = por %p221, %p222
      %p224 = scmp.ne.s32.totalorder %s210, %s211
      %p225 = scmp.eq.s32.totalorder %s25, 1
      %p226 = por %p224, %p225
      %p228 = scmp.ne.s32.totalorder %s211, %s227
      %p229 = scmp.eq.s32.totalorder %s25, 0
      %p230 = por %p228, %p229
      %p231 = scmp.le.s32.totalorder 1, %s19
      %p232 = scmp.lt.s32.totalorder %s19, 3
      %p233 = pnand %p231, %p232
      %p234 = pneg %p233
      // Predicated region
      $region9: #{tpu_custom_call.1} parent=5 // pred_check
        _
      $region10: #{tpu_custom_call.1} parent=5 // pred_check_branch
        %236 = sbr.rel (%p233) target = $region12
      $region11: #{tpu_custom_call.1} parent=5 // pred_region
        %s237 = ssub.s32 %s19, 1
        // Predicated region
        $region13: #{tpu_custom_call.1} parent=11 // pred_check
          %p238 = pneg %p92
        $region14: #{tpu_custom_call.1} parent=11 // pred_check_branch
          %240 = sbr.rel (%p238) target = $region16
        $region15: #{tpu_custom_call.1} parent=11 // pred_region
          _
        $region16: #{tpu_custom_call.1} parent=11 // pred_fallthru
          _
        // Predicated region
        $region17: #{tpu_custom_call.1} parent=11 // pred_check
          %p241 = pneg %p113
        $region18: #{tpu_custom_call.1} parent=11 // pred_check_branch
          %243 = sbr.rel (%p241) target = $region20
        $region19: #{tpu_custom_call.1} parent=11 // pred_region
          _
        $region20: #{tpu_custom_call.1} parent=11 // pred_fallthru
          _
        // Predicated region
        $region21: #{tpu_custom_call.1} parent=11 // pred_check
          %p244 = pneg %p134
        $region22: #{tpu_custom_call.1} parent=11 // pred_check_branch
          %246 = sbr.rel (%p244) target = $region24
        $region23: #{tpu_custom_call.1} parent=11 // pred_region
          %248 = vsyncadd [#allocation3], 0
          %s249 = sshll.u32 %s4, 4
          %s250 = int_to_ptr.hbm [resolvable:$true] %s249
          %s251 = sshll.u32 [#allocation2], 4
          %s252 = int_to_ptr.vmem [resolvable:$true] %s251
          %257 = dma.hbm_to_vmem [thread:$0]  %s250, 8192, %s252, [#allocation3], 256, 256, 16
        $region24: #{tpu_custom_call.1} parent=11 // pred_fallthru
          _
        // Predicated region
        $region25: #{tpu_custom_call.1} parent=11 // pred_check
          %p258 = pneg %p155
        $region26: #{tpu_custom_call.1} parent=11 // pred_check_branch
          %260 = sbr.rel (%p258) target = $region28
        $region27: #{tpu_custom_call.1} parent=11 // pred_region
          _
        $region28: #{tpu_custom_call.1} parent=11 // pred_fallthru
          _
        // Predicated region
        $region29: #{tpu_custom_call.1} parent=11 // pred_check
          %p261 = pneg %p176
        $region30: #{tpu_custom_call.1} parent=11 // pred_check_branch
          %263 = sbr.rel (%p261) target = $region32
        $region31: #{tpu_custom_call.1} parent=11 // pred_region
          %265 = vsyncadd [#allocation6], 0
          %s266 = sshll.u32 %s6, 4
          %s267 = int_to_ptr.hbm [resolvable:$true] %s266
          %s268 = sshll.u32 [#allocation5], 4
          %s269 = int_to_ptr.vmem [resolvable:$true] %s268
          %274 = dma.hbm_to_vmem [thread:$0]  %s267, 4096, %s269, [#allocation6], 128, 128, 8
        $region32: #{tpu_custom_call.1} parent=11 // pred_fallthru
          _
        // Predicated region
        $region33: #{tpu_custom_call.1} parent=11 // pred_check
          %p275 = pneg %p197
        $region34: #{tpu_custom_call.1} parent=11 // pred_check_branch
          %277 = sbr.rel (%p275) target = $region36
        $region35: #{tpu_custom_call.1} parent=11 // pred_region
          _
        $region36: #{tpu_custom_call.1} parent=11 // pred_fallthru
          _
      $region12: #{tpu_custom_call.1} parent=5 // pred_fallthru
        _
      %p278 = scmp.lt.s32.totalorder %s19, 2
      // Predicated region
      $region37: #{tpu_custom_call.1} parent=5 // pred_check
        %p279 = pneg %p278
      $region38: #{tpu_custom_call.1} parent=5 // pred_check_branch
        %281 = sbr.rel (%p279) target = $region40
      $region39: #{tpu_custom_call.1} parent=5 // pred_region
        // Predicated region
        $region41: #{tpu_custom_call.1} parent=39 // pred_check
          %p282 = pneg %p39
        $region42: #{tpu_custom_call.1} parent=39 // pred_check_branch
          %284 = sbr.rel (%p282) target = $region44
        $region43: #{tpu_custom_call.1} parent=39 // pred_region
          %s285 = smul.u32 4, %s19
          %s286 = ssub.s32 7, %s285
          %p287 = scmp.lt.s32.totalorder %s286, 4
          %s288 = scalar_select %p287, %s286, 4
          %s289 = smul.u32 8, %s288
          %p290 = scmp.lt.s32.totalorder %s285, 6
          %s291 = scalar_select %p290, %s285, 6
          %s292 = smul.addr %s291, 8
          %s293 = scalar_lea.vmem %s0, %s292
          %s294 = smul.u32 4, %s19
          %s295 = ssub.s32 7, %s294
          %p296 = scmp.lt.s32.totalorder %s295, 4
          %s297 = scalar_select %p296, %s295, 4
          %s298 = smul.u32 8, %s297
        $region44: #{tpu_custom_call.1} parent=39 // pred_fallthru
          _
        // Predicated region
        $region45: #{tpu_custom_call.1} parent=39 // pred_check
          %p299 = pneg %p65
        $region46: #{tpu_custom_call.1} parent=39 // pred_check_branch
          %301 = sbr.rel (%p299) target = $region48
        $region47: #{tpu_custom_call.1} parent=39 // pred_region
          %s302 = smul.u32 4, %s19
          %s303 = ssub.s32 7, %s302
          %p304 = scmp.lt.s32.totalorder %s303, 4
          %s305 = scalar_select %p304, %s303, 4
          %s306 = smul.u32 8, %s305
          %p307 = scmp.lt.s32.totalorder %s302, 6
          %s308 = scalar_select %p307, %s302, 6
          %s309 = smul.addr %s308, 8
          %s310 = scalar_lea.vmem %s1, %s309
          %s311 = smul.u32 4, %s19
          %s312 = ssub.s32 7, %s311
          %p313 = scmp.lt.s32.totalorder %s312, 4
          %s314 = scalar_select %p313, %s312, 4
          %s315 = smul.u32 8, %s314
        $region48: #{tpu_custom_call.1} parent=39 // pred_fallthru
          _
      $region40: #{tpu_custom_call.1} parent=5 // pred_fallthru
        _
      %p316 = scmp.le.s32.totalorder 1, %s19
      %p317 = scmp.lt.s32.totalorder %s19, 3
      %p318 = pnand %p316, %p317
      %p319 = pneg %p318
      // Predicated region
      $region49: #{tpu_custom_call.1} parent=5 // pred_check
        _
      $region50: #{tpu_custom_call.1} parent=5 // pred_check_branch
        %321 = sbr.rel (%p318) target = $region52
      $region51: #{tpu_custom_call.1} parent=5 // pred_region
        %s322 = ssub.s32 %s19, 1
        // Predicated region
        $region53: #{tpu_custom_call.1} parent=51 // pred_check
          %p323 = pneg %p134
        $region54: #{tpu_custom_call.1} parent=51 // pred_check_branch
          %325 = sbr.rel (%p323) target = $region56
        $region55: #{tpu_custom_call.1} parent=51 // pred_region
          %327 = dma.done [#allocation3], 8192
        $region56: #{tpu_custom_call.1} parent=51 // pred_fallthru
          _
        // Predicated region
        $region57: #{tpu_custom_call.1} parent=51 // pred_check
          %p328 = pneg %p176
        $region58: #{tpu_custom_call.1} parent=51 // pred_check_branch
          %330 = sbr.rel (%p328) target = $region60
        $region59: #{tpu_custom_call.1} parent=51 // pred_region
          %332 = dma.done [#allocation6], 4096
        $region60: #{tpu_custom_call.1} parent=51 // pred_fallthru
          _
        %s333 = smul.u32 4, %s24
        %s334 = ssub.s32 7, %s333
        %p335 = scmp.lt.s32.totalorder %s334, 4
        %s336 = scalar_select %p335, %s334, 4
        %s337 = smul.u32 8, %s336
        %p338 = scmp.lt.s32.totalorder %s333, 6
        %s339 = scalar_select %p338, %s333, 6
        %s340 = smul.addr %s339, 8
        %s341 = scalar_lea.vmem %s0, %s340
        %p342 = pneg %p45
        %p343 = pneg %p42
        %s344 = smul.u32 4, %s24
        %s345 = ssub.s32 7, %s344
        %p346 = scmp.lt.s32.totalorder %s345, 4
        %s347 = scalar_select %p346, %s345, 4
        %s348 = smul.u32 8, %s347
        %p349 = scmp.lt.s32.totalorder %s344, 6
        %s350 = scalar_select %p349, %s344, 6
        %s351 = smul.addr %s350, 8
        %s352 = scalar_lea.vmem %s1, %s351
        %p353 = pneg %p71
        %p354 = pneg %p68
        %p355 = pneg %p92
        %p356 = pneg %p89
        %p357 = pneg %p113
        %p358 = pneg %p110
        %p359 = pneg %p134
        %p360 = pneg %p131
        %p361 = pneg %p155
        %p362 = pneg %p152
        %p363 = pneg %p176
        %p364 = pneg %p173
        %p365 = pneg %p197
        %p366 = pneg %p194
        %p367 = pneg %p223
        %p368 = pneg %p220
        %s369 = sand.u32 %s210, 1
        %s370 = scalar_lea.sflag [#allocation4], %s369
        %s371 = sand.u32 %s210, 1
        %s372 = smul.addr %s371, 32
        %s373 = scalar_lea.vmem [#allocation7], %s372
        %s374 = smul.u32 4, %s24
        %s375 = ssub.s32 7, %s374
        %p376 = scmp.lt.s32.totalorder %s375, 4
        %s377 = scalar_select %p376, %s375, 4
        %s378 = smul.u32 8, %s377
        %p379 = scmp.lt.s32.totalorder %s374, 6
        %s380 = scalar_select %p379, %s374, 6
        %s381 = smul.addr %s380, 8
        %s382 = scalar_lea.vmem %s0, %s381
        %s383 = smul.u32 4, %s24
        %s384 = ssub.s32 7, %s383
        %p385 = scmp.lt.s32.totalorder %s384, 4
        %s386 = scalar_select %p385, %s384, 4
        %s387 = smul.u32 8, %s386
        %s388 = smul.u32 4, %s24
        %s389 = ssub.s32 7, %s388
        %p390 = scmp.lt.s32.totalorder %s389, 4
        %s391 = scalar_select %p390, %s389, 4
        %s392 = smul.u32 8, %s391
        %p393 = scmp.lt.s32.totalorder %s388, 6
        %s394 = scalar_select %p393, %s388, 6
        %s395 = smul.addr %s394, 8
        %s396 = scalar_lea.vmem %s1, %s395
        %s397 = smul.u32 4, %s24
        %s398 = ssub.s32 7, %s397
        %p399 = scmp.lt.s32.totalorder %s398, 4
        %s400 = scalar_select %p399, %s398, 4
        %s401 = smul.u32 8, %s400
        %s402 = smul.u32 4, %s24
        %s403 = ssub.s32 7, %s402
        %p404 = scmp.lt.s32.totalorder %s403, 4
        %s405 = scalar_select %p404, %s403, 4
        %s406 = smul.u32 8, %s405
        %v407 = vld [vmem:[%s382] sm:$0xff]
        %v408 = vld [vmem:[%s382 + $0x8] sm:$0xff]
        %v409 = vld [vmem:[%s382 + $0x10] sm:$0xff]
        %v410 = vld [vmem:[%s382 + $0x18] sm:$0xff]
        %v411 = vld [vmem:[%s396] sm:$0xff]
        %v412 = vld [vmem:[%s396 + $0x8] sm:$0xff]
        %v413 = vld [vmem:[%s396 + $0x10] sm:$0xff]
        %v414 = vld [vmem:[%s396 + $0x18] sm:$0xff]
        %v415 = vld [vmem:[%s2] sm:$0x77]
        %v416 = vld [vmem:[%s3] sm:$0x3]
        %418 = vset.pattern.permute.xlu0 0
        %419 = vperm.xlu0 %418, %v407
        %v420 = vpop.permute.xlu0 %419
        %423 = vset.pattern.permute.xlu0 0
        %424 = vperm.xlu0 %423, %v408
        %v425 = vpop.permute.xlu0 %424
        %428 = vset.pattern.permute.xlu0 0
        %429 = vperm.xlu0 %428, %v409
        %v430 = vpop.permute.xlu0 %429
        %433 = vset.pattern.permute.xlu0 0
        %434 = vperm.xlu0 %433, %v410
        %v435 = vpop.permute.xlu0 %434
        %v438 = vperm.slane %v415, 0
        %v439 = vperm.slane %v415, 4
        %v442 = vperm.slane %v438, 0
        %v443 = vperm.slane %v439, 0
        %v444 = vmul.f32 %v420, %v442
        %v445 = vmul.f32 %v420, %v443
        %v446 = vmul.f32 %v425, %v442
        %v447 = vmul.f32 %v425, %v443
        %v448 = vmul.f32 %v430, %v442
        %v449 = vmul.f32 %v430, %v443
        %v450 = vmul.f32 %v435, %v442
        %v451 = vmul.f32 %v435, %v443
        %v453 = vperm.slane %v416, 0
        %v454 = vperm.slane %v416, 1
        %v457 = vadd.f32 %v453, %v444
        %v458 = vadd.f32 %v454, %v445
        %v459 = vadd.f32 %v453, %v446
        %v460 = vadd.f32 %v454, %v447
        %v461 = vadd.f32 %v453, %v448
        %v462 = vadd.f32 %v454, %v449
        %v463 = vadd.f32 %v453, %v450
        %v464 = vadd.f32 %v454, %v451
        %465 = vset.pattern.permute.xlu0 1
        %466 = vperm.xlu0 %465, %v407
        %v467 = vpop.permute.xlu0 %466
        %469 = vset.pattern.permute.xlu0 1
        %470 = vperm.xlu0 %469, %v408
        %v471 = vpop.permute.xlu0 %470
        %473 = vset.pattern.permute.xlu0 1
        %474 = vperm.xlu0 %473, %v409
        %v475 = vpop.permute.xlu0 %474
        %477 = vset.pattern.permute.xlu0 1
        %478 = vperm.xlu0 %477, %v410
        %v479 = vpop.permute.xlu0 %478
        %v481 = vperm.slane %v415, 1
        %v482 = vperm.slane %v415, 5
        %v485 = vperm.slane %v481, 1
        %v486 = vperm.slane %v482, 1
        %v487 = vmul.f32 %v467, %v485
        %v488 = vmul.f32 %v467, %v486
        %v489 = vmul.f32 %v471, %v485
        %v490 = vmul.f32 %v471, %v486
        %v491 = vmul.f32 %v475, %v485
        %v492 = vmul.f32 %v475, %v486
        %v493 = vmul.f32 %v479, %v485
        %v494 = vmul.f32 %v479, %v486
        %v495 = vadd.f32 %v457, %v487
        %v496 = vadd.f32 %v458, %v488
        %v497 = vadd.f32 %v459, %v489
        %v498 = vadd.f32 %v460, %v490
        %v499 = vadd.f32 %v461, %v491
        %v500 = vadd.f32 %v462, %v492
        %v501 = vadd.f32 %v463, %v493
        %v502 = vadd.f32 %v464, %v494
        %504 = vset.pattern.permute.xlu0 0
        %505 = vperm.xlu0 %504, %v411
        %v506 = vpop.permute.xlu0 %505
        %509 = vset.pattern.permute.xlu0 0
        %510 = vperm.xlu0 %509, %v412
        %v511 = vpop.permute.xlu0 %510
        %514 = vset.pattern.permute.xlu0 0
        %515 = vperm.xlu0 %514, %v413
        %v516 = vpop.permute.xlu0 %515
        %519 = vset.pattern.permute.xlu0 0
        %520 = vperm.xlu0 %519, %v414
        %v521 = vpop.permute.xlu0 %520
        %v523 = vperm.slane %v415, 2
        %v524 = vperm.slane %v415, 6
        %v527 = vperm.slane %v523, 2
        %v528 = vperm.slane %v524, 2
        %v529 = vmul.f32 %v506, %v527
        %v530 = vmul.f32 %v506, %v528
        %v531 = vmul.f32 %v511, %v527
        %v532 = vmul.f32 %v511, %v528
        %v533 = vmul.f32 %v516, %v527
        %v534 = vmul.f32 %v516, %v528
        %v535 = vmul.f32 %v521, %v527
        %v536 = vmul.f32 %v521, %v528
        %v537 = vadd.f32 %v495, %v529
        %v538 = vadd.f32 %v496, %v530
        %v539 = vadd.f32 %v497, %v531
        %v540 = vadd.f32 %v498, %v532
        %v541 = vadd.f32 %v499, %v533
        %v542 = vadd.f32 %v500, %v534
        %v543 = vadd.f32 %v501, %v535
        %v544 = vadd.f32 %v502, %v536
        %v545 = vtanh.pop %v537
        %v546 = vtanh.pop %v538
        %v547 = vtanh.pop %v539
        %v548 = vtanh.pop %v540
        %v549 = vtanh.pop %v541
        %v550 = vtanh.pop %v542
        %v551 = vtanh.pop %v543
        %v552 = vtanh.pop %v544
        %v553 = vld [vmem:[#allocation2] sm:$0xff]
        %v554 = vld [vmem:[#allocation2 + $0x8] sm:$0xff]
        %v555 = vld [vmem:[#allocation2 + $0x10] sm:$0xff]
        %v556 = vld [vmem:[#allocation2 + $0x18] sm:$0xff]
        %v557 = vld [vmem:[#allocation2 + $0x20] sm:$0xff]
        %v558 = vld [vmem:[#allocation2 + $0x28] sm:$0xff]
        %v559 = vld [vmem:[#allocation2 + $0x30] sm:$0xff]
        %v560 = vld [vmem:[#allocation2 + $0x38] sm:$0xff]
        %v561 = vld [vmem:[#allocation2 + $0x40] sm:$0xff]
        %v562 = vld [vmem:[#allocation2 + $0x48] sm:$0xff]
        %v563 = vld [vmem:[#allocation2 + $0x50] sm:$0xff]
        %v564 = vld [vmem:[#allocation2 + $0x58] sm:$0xff]
        %v565 = vld [vmem:[#allocation2 + $0x60] sm:$0xff]
        %v566 = vld [vmem:[#allocation2 + $0x68] sm:$0xff]
        %v567 = vld [vmem:[#allocation2 + $0x70] sm:$0xff]
        %v568 = vld [vmem:[#allocation2 + $0x78] sm:$0xff]
        %v569 = vld [vmem:[#allocation2 + $0x80] sm:$0xff]
        %v570 = vld [vmem:[#allocation2 + $0x88] sm:$0xff]
        %v571 = vld [vmem:[#allocation2 + $0x90] sm:$0xff]
        %v572 = vld [vmem:[#allocation2 + $0x98] sm:$0xff]
        %v573 = vld [vmem:[#allocation2 + $0xa0] sm:$0xff]
        %v574 = vld [vmem:[#allocation2 + $0xa8] sm:$0xff]
        %v575 = vld [vmem:[#allocation2 + $0xb0] sm:$0xff]
        %v576 = vld [vmem:[#allocation2 + $0xb8] sm:$0xff]
        %v577 = vld [vmem:[#allocation2 + $0xc0] sm:$0xff]
        %v578 = vld [vmem:[#allocation2 + $0xc8] sm:$0xff]
        %v579 = vld [vmem:[#allocation2 + $0xd0] sm:$0xff]
        %v580 = vld [vmem:[#allocation2 + $0xd8] sm:$0xff]
        %v581 = vld [vmem:[#allocation2 + $0xe0] sm:$0xff]
        %v582 = vld [vmem:[#allocation2 + $0xe8] sm:$0xff]
        %v583 = vld [vmem:[#allocation2 + $0xf0] sm:$0xff]
        %v584 = vld [vmem:[#allocation2 + $0xf8] sm:$0xff]
        %v585 = vld [vmem:[#allocation2 + $0x100] sm:$0xff]
        %v586 = vld [vmem:[#allocation2 + $0x108] sm:$0xff]
        %v587 = vld [vmem:[#allocation2 + $0x110] sm:$0xff]
        %v588 = vld [vmem:[#allocation2 + $0x118] sm:$0xff]
        %v589 = vld [vmem:[#allocation2 + $0x120] sm:$0xff]
        %v590 = vld [vmem:[#allocation2 + $0x128] sm:$0xff]
        %v591 = vld [vmem:[#allocation2 + $0x130] sm:$0xff]
        %v592 = vld [vmem:[#allocation2 + $0x138] sm:$0xff]
        %v593 = vld [vmem:[#allocation2 + $0x140] sm:$0xff]
        %v594 = vld [vmem:[#allocation2 + $0x148] sm:$0xff]
        %v595 = vld [vmem:[#allocation2 + $0x150] sm:$0xff]
        %v596 = vld [vmem:[#allocation2 + $0x158] sm:$0xff]
        %v597 = vld [vmem:[#allocation2 + $0x160] sm:$0xff]
        %v598 = vld [vmem:[#allocation2 + $0x168] sm:$0xff]
        %v599 = vld [vmem:[#allocation2 + $0x170] sm:$0xff]
        %v600 = vld [vmem:[#allocation2 + $0x178] sm:$0xff]
        %v601 = vld [vmem:[#allocation2 + $0x180] sm:$0xff]
        %v602 = vld [vmem:[#allocation2 + $0x188] sm:$0xff]
        %v603 = vld [vmem:[#allocation2 + $0x190] sm:$0xff]
        %v604 = vld [vmem:[#allocation2 + $0x198] sm:$0xff]
        %v605 = vld [vmem:[#allocation2 + $0x1a0] sm:$0xff]
        %v606 = vld [vmem:[#allocation2 + $0x1a8] sm:$0xff]
        %v607 = vld [vmem:[#allocation2 + $0x1b0] sm:$0xff]
        %v608 = vld [vmem:[#allocation2 + $0x1b8] sm:$0xff]
        %v609 = vld [vmem:[#allocation2 + $0x1c0] sm:$0xff]
        %v610 = vld [vmem:[#allocation2 + $0x1c8] sm:$0xff]
        %v611 = vld [vmem:[#allocation2 + $0x1d0] sm:$0xff]
        %v612 = vld [vmem:[#allocation2 + $0x1d8] sm:$0xff]
        %v613 = vld [vmem:[#allocation2 + $0x1e0] sm:$0xff]
        %v614 = vld [vmem:[#allocation2 + $0x1e8] sm:$0xff]
        %v615 = vld [vmem:[#allocation2 + $0x1f0] sm:$0xff]
        %v616 = vld [vmem:[#allocation2 + $0x1f8] sm:$0xff]
        %v617 = vld [vmem:[%s5] sm:$0x3]
        %v619 = vperm.slane %v617, 0
        %v620 = vperm.slane %v617, 1
        %623 = vmatpush.msra.mxu0 %v583
        %624 = vmatpush.msra.mxu0 %v581
        %625 = vmatpush.msra.mxu0 %v579
        %626 = vmatpush.msra.mxu0 %v577
        %627 = vmatpush.msra.mxu0 %v575
        %628 = vmatpush.msra.mxu0 %v573
        %629 = vmatpush.msra.mxu0 %v571
        %630 = vmatpush.msra.mxu0 %v569
        %631 = vmatpush.msra.mxu0 %v567
        %632 = vmatpush.msra.mxu0 %v565
        %633 = vmatpush.msra.mxu0 %v563
        %634 = vmatpush.msra.mxu0 %v561
        %635 = vmatpush.msra.mxu0 %v559
        %636 = vmatpush.msra.mxu0 %v557
        %637 = vmatpush.msra.mxu0 %v555
        %638 = vmatpush.msra.mxu0 %v553
        %639 = vmatmul.f32.gmra.mxu0 %v545
        %v640 = vpop.f32.mrf.mxu0
        %v641 = vadd.f32 %v619, %v640
        %642 = vmatmul.f32.gmra.mxu0 %v547
        %v643 = vpop.f32.mrf.mxu0
        %v644 = vadd.f32 %v619, %v643
        %645 = vmatmul.f32.gmra.mxu0 %v549
        %v646 = vpop.f32.mrf.mxu0
        %v647 = vadd.f32 %v619, %v646
        %648 = vmatmul.f32.gmra.mxu0 %v551
        %v649 = vpop.f32.mrf.mxu0
        %v650 = vadd.f32 %v619, %v649
        %651 = vdwg.mxu0
        %652 = vmatpush.msra.mxu0 %v615
        %653 = vmatpush.msra.mxu0 %v613
        %654 = vmatpush.msra.mxu0 %v611
        %655 = vmatpush.msra.mxu0 %v609
        %656 = vmatpush.msra.mxu0 %v607
        %657 = vmatpush.msra.mxu0 %v605
        %658 = vmatpush.msra.mxu0 %v603
        %659 = vmatpush.msra.mxu0 %v601
        %660 = vmatpush.msra.mxu0 %v599
        %661 = vmatpush.msra.mxu0 %v597
        %662 = vmatpush.msra.mxu0 %v595
        %663 = vmatpush.msra.mxu0 %v593
        %664 = vmatpush.msra.mxu0 %v591
        %665 = vmatpush.msra.mxu0 %v589
        %666 = vmatpush.msra.mxu0 %v587
        %667 = vmatpush.msra.mxu0 %v585
        %668 = vmatmul.f32.gmra.mxu0 %v546
        %v669 = vpop.f32.mrf.mxu0
        %v670 = vadd.f32 %v641, %v669
        %671 = vmatmul.f32.gmra.mxu0 %v548
        %v672 = vpop.f32.mrf.mxu0
        %v673 = vadd.f32 %v644, %v672
        %674 = vmatmul.f32.gmra.mxu0 %v550
        %v675 = vpop.f32.mrf.mxu0
        %v676 = vadd.f32 %v647, %v675
        %677 = vmatmul.f32.gmra.mxu0 %v552
        %v678 = vpop.f32.mrf.mxu0
        %v679 = vadd.f32 %v650, %v678
        %680 = vdwg.mxu0
        %681 = vmatpush.msra.mxu0 %v584
        %682 = vmatpush.msra.mxu0 %v582
        %683 = vmatpush.msra.mxu0 %v580
        %684 = vmatpush.msra.mxu0 %v578
        %685 = vmatpush.msra.mxu0 %v576
        %686 = vmatpush.msra.mxu0 %v574
        %687 = vmatpush.msra.mxu0 %v572
        %688 = vmatpush.msra.mxu0 %v570
        %689 = vmatpush.msra.mxu0 %v568
        %690 = vmatpush.msra.mxu0 %v566
        %691 = vmatpush.msra.mxu0 %v564
        %692 = vmatpush.msra.mxu0 %v562
        %693 = vmatpush.msra.mxu0 %v560
        %694 = vmatpush.msra.mxu0 %v558
        %695 = vmatpush.msra.mxu0 %v556
        %696 = vmatpush.msra.mxu0 %v554
        %697 = vmatmul.f32.gmra.mxu0 %v545
        %v698 = vpop.f32.mrf.mxu0
        %v699 = vadd.f32 %v620, %v698
        %700 = vmatmul.f32.gmra.mxu0 %v547
        %v701 = vpop.f32.mrf.mxu0
        %v702 = vadd.f32 %v620, %v701
        %703 = vmatmul.f32.gmra.mxu0 %v549
        %v704 = vpop.f32.mrf.mxu0
        %v705 = vadd.f32 %v620, %v704
        %706 = vmatmul.f32.gmra.mxu0 %v551
        %v707 = vpop.f32.mrf.mxu0
        %v708 = vadd.f32 %v620, %v707
        %709 = vdwg.mxu0
        %710 = vmatpush.msra.mxu0 %v616
        %711 = vmatpush.msra.mxu0 %v614
        %712 = vmatpush.msra.mxu0 %v612
        %713 = vmatpush.msra.mxu0 %v610
        %714 = vmatpush.msra.mxu0 %v608
        %715 = vmatpush.msra.mxu0 %v606
        %716 = vmatpush.msra.mxu0 %v604
        %717 = vmatpush.msra.mxu0 %v602
        %718 = vmatpush.msra.mxu0 %v600
        %719 = vmatpush.msra.mxu0 %v598
        %720 = vmatpush.msra.mxu0 %v596
        %721 = vmatpush.msra.mxu0 %v594
        %722 = vmatpush.msra.mxu0 %v592
        %723 = vmatpush.msra.mxu0 %v590
        %724 = vmatpush.msra.mxu0 %v588
        %725 = vmatpush.msra.mxu0 %v586
        %726 = vmatmul.f32.gmra.mxu0 %v546
        %v727 = vpop.f32.mrf.mxu0
        %v728 = vadd.f32 %v699, %v727
        %729 = vmatmul.f32.gmra.mxu0 %v548
        %v730 = vpop.f32.mrf.mxu0
        %v731 = vadd.f32 %v702, %v730
        %732 = vmatmul.f32.gmra.mxu0 %v550
        %v733 = vpop.f32.mrf.mxu0
        %v734 = vadd.f32 %v705, %v733
        %735 = vmatmul.f32.gmra.mxu0 %v552
        %v736 = vpop.f32.mrf.mxu0
        %v737 = vadd.f32 %v708, %v736
        %738 = vdwg.mxu0
        %v739 = vtanh.pop %v670
        %v740 = vtanh.pop %v728
        %v741 = vtanh.pop %v673
        %v742 = vtanh.pop %v731
        %v743 = vtanh.pop %v676
        %v744 = vtanh.pop %v734
        %v745 = vtanh.pop %v679
        %v746 = vtanh.pop %v737
        %v747 = vld [vmem:[#allocation5] sm:$0xff]
        %v748 = vld [vmem:[#allocation5 + $0x8] sm:$0xff]
        %v749 = vld [vmem:[#allocation5 + $0x10] sm:$0xff]
        %v750 = vld [vmem:[#allocation5 + $0x18] sm:$0xff]
        %v751 = vld [vmem:[#allocation5 + $0x20] sm:$0xff]
        %v752 = vld [vmem:[#allocation5 + $0x28] sm:$0xff]
        %v753 = vld [vmem:[#allocation5 + $0x30] sm:$0xff]
        %v754 = vld [vmem:[#allocation5 + $0x38] sm:$0xff]
        %v755 = vld [vmem:[#allocation5 + $0x40] sm:$0xff]
        %v756 = vld [vmem:[#allocation5 + $0x48] sm:$0xff]
        %v757 = vld [vmem:[#allocation5 + $0x50] sm:$0xff]
        %v758 = vld [vmem:[#allocation5 + $0x58] sm:$0xff]
        %v759 = vld [vmem:[#allocation5 + $0x60] sm:$0xff]
        %v760 = vld [vmem:[#allocation5 + $0x68] sm:$0xff]
        %v761 = vld [vmem:[#allocation5 + $0x70] sm:$0xff]
        %v762 = vld [vmem:[#allocation5 + $0x78] sm:$0xff]
        %v763 = vld [vmem:[#allocation5 + $0x80] sm:$0xff]
        %v764 = vld [vmem:[#allocation5 + $0x88] sm:$0xff]
        %v765 = vld [vmem:[#allocation5 + $0x90] sm:$0xff]
        %v766 = vld [vmem:[#allocation5 + $0x98] sm:$0xff]
        %v767 = vld [vmem:[#allocation5 + $0xa0] sm:$0xff]
        %v768 = vld [vmem:[#allocation5 + $0xa8] sm:$0xff]
        %v769 = vld [vmem:[#allocation5 + $0xb0] sm:$0xff]
        %v770 = vld [vmem:[#allocation5 + $0xb8] sm:$0xff]
        %v771 = vld [vmem:[#allocation5 + $0xc0] sm:$0xff]
        %v772 = vld [vmem:[#allocation5 + $0xc8] sm:$0xff]
        %v773 = vld [vmem:[#allocation5 + $0xd0] sm:$0xff]
        %v774 = vld [vmem:[#allocation5 + $0xd8] sm:$0xff]
        %v775 = vld [vmem:[#allocation5 + $0xe0] sm:$0xff]
        %v776 = vld [vmem:[#allocation5 + $0xe8] sm:$0xff]
        %v777 = vld [vmem:[#allocation5 + $0xf0] sm:$0xff]
        %v778 = vld [vmem:[#allocation5 + $0xf8] sm:$0xff]
        %v779 = vld [vmem:[%s7] sm:$0x1]
        %v781 = vperm.slane %v779, 0
        %783 = vmatpush.msra.mxu0 %v762
        %784 = vmatpush.msra.mxu0 %v761
        %785 = vmatpush.msra.mxu0 %v760
        %786 = vmatpush.msra.mxu0 %v759
        %787 = vmatpush.msra.mxu0 %v758
        %788 = vmatpush.msra.mxu0 %v757
        %789 = vmatpush.msra.mxu0 %v756
        %790 = vmatpush.msra.mxu0 %v755
        %791 = vmatpush.msra.mxu0 %v754
        %792 = vmatpush.msra.mxu0 %v753
        %793 = vmatpush.msra.mxu0 %v752
        %794 = vmatpush.msra.mxu0 %v751
        %795 = vmatpush.msra.mxu0 %v750
        %796 = vmatpush.msra.mxu0 %v749
        %797 = vmatpush.msra.mxu0 %v748
        %798 = vmatpush.msra.mxu0 %v747
        %799 = vmatmul.f32.gmra.mxu0 %v739
        %v800 = vpop.f32.mrf.mxu0
        %v801 = vadd.f32 %v781, %v800
        %802 = vmatmul.f32.gmra.mxu0 %v741
        %v803 = vpop.f32.mrf.mxu0
        %v804 = vadd.f32 %v781, %v803
        %805 = vmatmul.f32.gmra.mxu0 %v743
        %v806 = vpop.f32.mrf.mxu0
        %v807 = vadd.f32 %v781, %v806
        %808 = vmatmul.f32.gmra.mxu0 %v745
        %v809 = vpop.f32.mrf.mxu0
        %v810 = vadd.f32 %v781, %v809
        %811 = vdwg.mxu0
        %812 = vmatpush.msra.mxu0 %v778
        %813 = vmatpush.msra.mxu0 %v777
        %814 = vmatpush.msra.mxu0 %v776
        %815 = vmatpush.msra.mxu0 %v775
        %816 = vmatpush.msra.mxu0 %v774
        %817 = vmatpush.msra.mxu0 %v773
        %818 = vmatpush.msra.mxu0 %v772
        %819 = vmatpush.msra.mxu0 %v771
        %820 = vmatpush.msra.mxu0 %v770
        %821 = vmatpush.msra.mxu0 %v769
        %822 = vmatpush.msra.mxu0 %v768
        %823 = vmatpush.msra.mxu0 %v767
        %824 = vmatpush.msra.mxu0 %v766
        %825 = vmatpush.msra.mxu0 %v765
        %826 = vmatpush.msra.mxu0 %v764
        %827 = vmatpush.msra.mxu0 %v763
        %828 = vmatmul.f32.gmra.mxu0 %v740
        %v829 = vpop.f32.mrf.mxu0
        %v830 = vadd.f32 %v801, %v829
        %831 = vmatmul.f32.gmra.mxu0 %v742
        %v832 = vpop.f32.mrf.mxu0
        %v833 = vadd.f32 %v804, %v832
        %834 = vmatmul.f32.gmra.mxu0 %v744
        %v835 = vpop.f32.mrf.mxu0
        %v836 = vadd.f32 %v807, %v835
        %837 = vmatmul.f32.gmra.mxu0 %v746
        %v838 = vpop.f32.mrf.mxu0
        %v839 = vadd.f32 %v810, %v838
        %840 = vdwg.mxu0
        %841 = vst [vmem:[%s373] sm:$0xff] %v830
        %842 = vst [vmem:[%s373 + $0x8] sm:$0xff] %v833
        %843 = vst [vmem:[%s373 + $0x10] sm:$0xff] %v836
        %844 = vst [vmem:[%s373 + $0x18] sm:$0xff] %v839
        %s845 = sand.u32 %s210, 1
        %s846 = scalar_lea.sflag [#allocation4], %s845
        %s847 = sand.u32 %s210, 1
        %s848 = smul.addr %s847, 32
        %s849 = scalar_lea.vmem [#allocation7], %s848
        // Predicated region
        $region61: #{tpu_custom_call.1} parent=51 // pred_check
          %p850 = pneg %p220
        $region62: #{tpu_custom_call.1} parent=51 // pred_check_branch
          %852 = sbr.rel (%p850) target = $region64
        $region63: #{tpu_custom_call.1} parent=51 // pred_region
          %s853 = smul.u32 4, %s24
          %s854 = ssub.s32 7, %s853
          %p855 = scmp.lt.s32.totalorder %s854, 4
          %s856 = scalar_select %p855, %s854, 4
          %s857 = smul.u32 8, %s856
          %s858 = ssub.s32 32, %s857
          %s859 = sshll.u32 %s858, 4
          %860 = vsyncadd %s846, %s859
          %p861 = scmp.ne.s32.totalorder 0, %s857
          %s862 = smul.addr %s853, 8
          %s863 = scalar_lea.hbm %s8, %s862
          %s864 = smul.u32 8, %s856
          %s865 = sshll.u32 %s849, 4
          %s866 = int_to_ptr.vmem [resolvable:$true] %s865
          %s867 = sshll.u32 %s863, 4
          %s868 = int_to_ptr.hbm [resolvable:$true] %s867
          %s869 = sshll.u32 %s864, 4
          %873 = dma.vmem_to_hbm [thread:$0]  (%p861), %s866, %s869, %s868, %s846, 128, 128, 8
        $region64: #{tpu_custom_call.1} parent=51 // pred_fallthru
          _
      $region52: #{tpu_custom_call.1} parent=5 // pred_fallthru
        _
      %p874 = scmp.le.s32.totalorder 2, %s19
      // Predicated region
      $region65: #{tpu_custom_call.1} parent=5 // pred_check
        %p875 = pneg %p874
      $region66: #{tpu_custom_call.1} parent=5 // pred_check_branch
        %877 = sbr.rel (%p875) target = $region68
      $region67: #{tpu_custom_call.1} parent=5 // pred_region
        %s878 = ssub.s32 %s19, 2
        // Predicated region
        $region69: #{tpu_custom_call.1} parent=67 // pred_check
          %p879 = pneg %p226
        $region70: #{tpu_custom_call.1} parent=67 // pred_check_branch
          %881 = sbr.rel (%p879) target = $region72
        $region71: #{tpu_custom_call.1} parent=67 // pred_region
          %s882 = sand.u32 %s211, 1
          %s883 = scalar_lea.sflag [#allocation4], %s882
          %s884 = sand.u32 %s211, 1
          %s885 = smul.addr %s884, 32
          %s886 = scalar_lea.vmem [#allocation7], %s885
          %888 = dma.done %s883, 512
        $region72: #{tpu_custom_call.1} parent=67 // pred_fallthru
          _
      $region68: #{tpu_custom_call.1} parent=5 // pred_fallthru
        _
    $region6: #{tpu_custom_call.1} parent=1 // loop_footer
      %s23 = sadd.s32 1, %s19
    $region7: #{tpu_custom_call.1} parent=1 // loop_footer_branch
      %18 = sbr.rel target = $region3
    $region8: #{tpu_custom_call.1} parent=1 // loop_exit
      _
    %889 = vsyncpa [#allocation3], 1
    %s890 = scalar_lea.sflag [#allocation3], 1
    %891 = vsyncpa %s890, 1
    %892 = vsyncpa [#allocation6], 1
    %893 = vsyncpa [#allocation4], 1
    %s894 = scalar_lea.sflag [#allocation4], 1
    %895 = vsyncpa %s894, 1

</llo_original>
